<compile_context>
chip_gen: v5e
topology: v5e:2x2
jax: 0.10.0
libtpu: 0.0.40
codegen_flags: <defaults>
</compile_context>

<pallas_src>
import math

import jax
import jax.numpy as jnp
from jax.experimental import pallas as pl
from jax.experimental.pallas import tpu as pltpu


def make_gpt2_attention_kernel(seq_len, embed_dim, num_heads, head_dim):
    inv_scale = float(1.0 / math.sqrt(float(head_dim)))

    def kernel(x_ref, mask_ref, wq_ref, wk_ref, wv_ref,
               bq_ref, bk_ref, bv_ref, wp_ref, bp_ref, o_ref):
        h = pl.program_id(1)

        x = x_ref[0]                 # (S, E)  bf16 (pre-cast in wrapper)
        mask = mask_ref[...]         # (S, S)  f32 additive causal bias (0 / -1e4)

        # Per-head q/k/v projections: bf16 MXU operands, f32 accumulation, f32 bias add.
        q = jnp.dot(x, wq_ref[0], preferred_element_type=jnp.float32) + bq_ref[0]   # (S, D)
        k = jnp.dot(x, wk_ref[0], preferred_element_type=jnp.float32) + bk_ref[0]   # (S, D)
        v = jnp.dot(x, wv_ref[0], preferred_element_type=jnp.float32) + bv_ref[0]   # (S, D)

        # Scores: contract last dim of q with last dim of k (no explicit transpose emitted).
        s = jax.lax.dot_general(
            q.astype(jnp.bfloat16), k.astype(jnp.bfloat16),
            dimension_numbers=(((1,), (1,)), ((), ())),
            preferred_element_type=jnp.float32)                                      # (S, S)
        s = s * inv_scale + mask

        # Numerically-stable softmax in f32; approx reciprocal runs on the EUP slot.
        m = jnp.max(s, axis=-1, keepdims=True)
        e = jnp.exp(s - m)
        p = e * pl.reciprocal(jnp.sum(e, axis=-1, keepdims=True), approx=True)

        attn = jnp.dot(p.astype(jnp.bfloat16), v.astype(jnp.bfloat16),
                       preferred_element_type=jnp.float32)                           # (S, D)

        # This head's slice of c_proj; accumulate heads into the resident output block
        # (lane-dense: full E on the last dim).
        partial = jnp.dot(attn.astype(jnp.bfloat16), wp_ref[0],
                          preferred_element_type=jnp.float32)                        # (S, E)

        @pl.when(h == 0)
        def _():
            o_ref[0] = partial + bp_ref[...]

        @pl.when(h > 0)
        def _():
            o_ref[0] = o_ref[0] + partial

    return kernel


def gpt2_attention(hidden_states, w_attn, b_attn, w_proj, b_proj, num_heads):
    """Fused GPT2Attention forward (default path). hidden_states: (B, S, E) f32.

    w_attn: (E, 3E), b_attn: (3E,)  -- c_attn Conv1D
    w_proj: (E, E),  b_proj: (E,)   -- c_proj Conv1D
    """
    B, S, E = hidden_states.shape
    H = num_heads
    D = E // H
    assert D * H == E

    # Pre-permute weights so heads live on a leading axis: no lane slicing or head
    # concatenation inside the kernel. Cast MXU operands to bf16 (halves weight DMA too).
    def per_head(w_slice):          # (E, E) -> (H, E, D)
        return jnp.transpose(w_slice.reshape(E, H, D), (1, 0, 2))

    wq = per_head(w_attn[:, 0 * E:1 * E]).astype(jnp.bfloat16)
    wk = per_head(w_attn[:, 1 * E:2 * E]).astype(jnp.bfloat16)
    wv = per_head(w_attn[:, 2 * E:3 * E]).astype(jnp.bfloat16)
    bq = b_attn[0 * E:1 * E].reshape(H, 1, D).astype(jnp.float32)
    bk = b_attn[1 * E:2 * E].reshape(H, 1, D).astype(jnp.float32)
    bv = b_attn[2 * E:3 * E].reshape(H, 1, D).astype(jnp.float32)
    wp = w_proj.reshape(H, D, E).astype(jnp.bfloat16)            # row-block of c_proj per head
    bp = b_proj.reshape(1, E).astype(jnp.float32)

    x_bf16 = hidden_states.astype(jnp.bfloat16)

    # Additive causal bias, computed once in the wrapper (not per head in-kernel).
    causal = jnp.tril(jnp.ones((S, S), dtype=bool))
    mask_bias = jnp.where(causal, 0.0, -10000.0).astype(jnp.float32)

    kernel = make_gpt2_attention_kernel(S, E, H, D)

    # TODO(synk): for long sequences (S >= 1024) add flash-style q/kv tiling (extra parallel
    # q-tile grid axis + online softmax) and pair heads so MXU contractions are 128-wide.
    return pl.pallas_call(
        kernel,
        out_shape=jax.ShapeDtypeStruct((B, S, E), jnp.float32),
        grid_spec=pltpu.PrefetchScalarGridSpec(
            num_scalar_prefetch=0,
            grid=(B, H),                                  # head axis last = c_proj reduction
            in_specs=[
                pl.BlockSpec((1, S, E), lambda b, h: (b, 0, 0)),   # x (bf16)
                pl.BlockSpec((S, S), lambda b, h: (0, 0)),         # additive causal bias
                pl.BlockSpec((1, E, D), lambda b, h: (h, 0, 0)),   # wq (per head)
                pl.BlockSpec((1, E, D), lambda b, h: (h, 0, 0)),   # wk
                pl.BlockSpec((1, E, D), lambda b, h: (h, 0, 0)),   # wv
                pl.BlockSpec((1, 1, D), lambda b, h: (h, 0, 0)),   # bq
                pl.BlockSpec((1, 1, D), lambda b, h: (h, 0, 0)),   # bk
                pl.BlockSpec((1, 1, D), lambda b, h: (h, 0, 0)),   # bv
                pl.BlockSpec((1, D, E), lambda b, h: (h, 0, 0)),   # wp row-block (per head)
                pl.BlockSpec((1, E), lambda b, h: (0, 0)),         # bp
            ],
            out_specs=pl.BlockSpec((1, S, E), lambda b, h: (b, 0, 0)),
        ),
        compiler_params=pltpu.CompilerParams(
            dimension_semantics=("parallel", "arbitrary")),
    )(x_bf16, mask_bias, wq, wk, wv, bq, bk, bv, wp, bp)


def gpt2_attention_ref(x, w_attn, b_attn, w_proj, b_proj, num_heads):
    """Plain-JAX f32 reference mirroring the PyTorch forward (default path)."""
    B, S, E = x.shape
    D = E // num_heads
    qkv = jnp.einsum('bse,ef->bsf', x, w_attn) + b_attn
    q, k, v = jnp.split(qkv, 3, axis=-1)

    def split_heads(t):
        return t.reshape(B, S, num_heads, D).transpose(0, 2, 1, 3)  # (B,H,S,D)

    q, k, v = split_heads(q), split_heads(k), split_heads(v)
    s = jnp.einsum('bhqd,bhkd->bhqk', q, k) / jnp.float32(math.sqrt(D))
    causal = jnp.tril(jnp.ones((S, S), dtype=bool))[None, None]
    s = jnp.where(causal, s, jnp.float32(-10000.0))
    p = jax.nn.softmax(s, axis=-1)
    o = jnp.einsum('bhqk,bhkd->bhqd', p, v)
    o = o.transpose(0, 2, 1, 3).reshape(B, S, E)
    return jnp.einsum('bse,ef->bsf', o, w_proj) + b_proj


if __name__ == "__main__":
    # config: hidden_size=32, num_attention_heads=4, seq=8, batch=2
    B, S, E, H = 2, 8, 32, 4
    key = jax.random.PRNGKey(0)
    k1, k2, k3, k4, k5 = jax.random.split(key, 5)

    hidden_states = jax.random.normal(k1, (B, S, E), dtype=jnp.float32)
    # Conv1D init (HF): weight ~ N(0, 0.02), bias zeros
    w_attn = 0.02 * jax.random.normal(k2, (E, 3 * E), dtype=jnp.float32)
    b_attn = jnp.zeros((3 * E,), dtype=jnp.float32)
    w_proj = 0.02 * jax.random.normal(k3, (E, E), dtype=jnp.float32)
    b_proj = jnp.zeros((E,), dtype=jnp.float32)

    out = gpt2_attention(hidden_states, w_attn, b_attn, w_proj, b_proj, H)
    out = jax.block_until_ready(out)

    ref = gpt2_attention_ref(hidden_states, w_attn, b_attn, w_proj, b_proj, H)
    assert out.shape == (B, S, E)
    # bf16 MXU operands with f32 accumulation: compare at relaxed tolerance vs f32 reference.
    assert jnp.allclose(out, ref, atol=1e-2, rtol=1e-2), "mismatch vs reference"

    # TODO(synk): adapters / LoRA / prefix-tuning / cross-attention / kv-cache / training-mode
    # dropout branches are config-gated off in the default path and are not implemented.
    print("KERNEL_OK")
</pallas_src>

<mosaic_0001>
module attributes {stable_mosaic.version = 11 : i64} {
  func.func @kernel(%arg0: i32, %arg1: i32, %arg2: memref<1x8x32xbf16, #tpu.memory_space<vmem>>, %arg3: memref<8x8xf32, #tpu.memory_space<vmem>>, %arg4: memref<1x32x8xbf16, #tpu.memory_space<vmem>>, %arg5: memref<1x32x8xbf16, #tpu.memory_space<vmem>>, %arg6: memref<1x32x8xbf16, #tpu.memory_space<vmem>>, %arg7: memref<1x1x8xf32, #tpu.memory_space<vmem>>, %arg8: memref<1x1x8xf32, #tpu.memory_space<vmem>>, %arg9: memref<1x1x8xf32, #tpu.memory_space<vmem>>, %arg10: memref<1x8x32xbf16, #tpu.memory_space<vmem>>, %arg11: memref<1x32xf32, #tpu.memory_space<vmem>>, %arg12: memref<1x8x32xf32, #tpu.memory_space<vmem>>) attributes {dimension_semantics = [#tpu.dimension_semantics<parallel>, #tpu.dimension_semantics<arbitrary>], iteration_bounds = array<i64: 2, 4>, scalar_prefetch = 0 : i64, scratch_operands = 0 : i64, tpu.core_type = #tpu.core_type<tc>, window_params = [{transform_indices = @transform_0, window_bounds = array<i64: 1, 8, 32>}, {pipeline_mode = #tpu.pipeline_mode<synchronous>, transform_indices = @transform_1, window_bounds = array<i64: 8, 8>}, {transform_indices = @transform_2, window_bounds = array<i64: 1, 32, 8>}, {transform_indices = @transform_3, window_bounds = array<i64: 1, 32, 8>}, {transform_indices = @transform_4, window_bounds = array<i64: 1, 32, 8>}, {transform_indices = @transform_5, window_bounds = array<i64: 1, 1, 8>}, {transform_indices = @transform_6, window_bounds = array<i64: 1, 1, 8>}, {transform_indices = @transform_7, window_bounds = array<i64: 1, 1, 8>}, {transform_indices = @transform_8, window_bounds = array<i64: 1, 8, 32>}, {pipeline_mode = #tpu.pipeline_mode<synchronous>, transform_indices = @transform_9, window_bounds = array<i64: 1, 32>}, {transform_indices = @transform_10, window_bounds = array<i64: 1, 8, 32>}]} {
    %c0 = arith.constant 0 : index
    %c0_0 = arith.constant 0 : index
    %c0_1 = arith.constant 0 : index
    %0 = vector.load %arg2[%c0, %c0_0, %c0_1] : memref<1x8x32xbf16, #tpu.memory_space<vmem>>, vector<1x8x32xbf16>
    %1 = vector.shape_cast %0 : vector<1x8x32xbf16> to vector<8x32xbf16>
    %c0_2 = arith.constant 0 : index
    %c0_3 = arith.constant 0 : index
    %2 = vector.load %arg3[%c0_2, %c0_3] : memref<8x8xf32, #tpu.memory_space<vmem>>, vector<8x8xf32>
    %c0_4 = arith.constant 0 : index
    %c0_5 = arith.constant 0 : index
    %c0_6 = arith.constant 0 : index
    %3 = vector.load %arg4[%c0_4, %c0_5, %c0_6] : memref<1x32x8xbf16, #tpu.memory_space<vmem>>, vector<1x32x8xbf16>
    %4 = vector.shape_cast %3 : vector<1x32x8xbf16> to vector<32x8xbf16>
    %cst = arith.constant dense<0.000000e+00> : vector<8x8xf32>
    %5 = tpu.matmul %1, %4, %cst {dimension_numbers = #tpu.dot_dimension_numbers<[1], [0], [0], [1], [0, 0, 1, 1], [], []>} : vector<8x32xbf16>, vector<32x8xbf16>, vector<8x8xf32> -> vector<8x8xf32>
    %c0_7 = arith.constant 0 : index
    %c0_8 = arith.constant 0 : index
    %c0_9 = arith.constant 0 : index
    %6 = vector.load %arg7[%c0_7, %c0_8, %c0_9] : memref<1x1x8xf32, #tpu.memory_space<vmem>>, vector<1x1x8xf32>
    %7 = vector.shape_cast %6 : vector<1x1x8xf32> to vector<1x8xf32>
    %8 = vector.broadcast %7 : vector<1x8xf32> to vector<8x8xf32>
    %9 = arith.addf %5, %8 : vector<8x8xf32>
    %c0_10 = arith.constant 0 : index
    %c0_11 = arith.constant 0 : index
    %c0_12 = arith.constant 0 : index
    %10 = vector.load %arg5[%c0_10, %c0_11, %c0_12] : memref<1x32x8xbf16, #tpu.memory_space<vmem>>, vector<1x32x8xbf16>
    %11 = vector.shape_cast %10 : vector<1x32x8xbf16> to vector<32x8xbf16>
    %cst_13 = arith.constant dense<0.000000e+00> : vector<8x8xf32>
    %12 = tpu.matmul %1, %11, %cst_13 {dimension_numbers = #tpu.dot_dimension_numbers<[1], [0], [0], [1], [0, 0, 1, 1], [], []>} : vector<8x32xbf16>, vector<32x8xbf16>, vector<8x8xf32> -> vector<8x8xf32>
    %c0_14 = arith.constant 0 : index
    %c0_15 = arith.constant 0 : index
    %c0_16 = arith.constant 0 : index
    %13 = vector.load %arg8[%c0_14, %c0_15, %c0_16] : memref<1x1x8xf32, #tpu.memory_space<vmem>>, vector<1x1x8xf32>
    %14 = vector.shape_cast %13 : vector<1x1x8xf32> to vector<1x8xf32>
    %15 = vector.broadcast %14 : vector<1x8xf32> to vector<8x8xf32>
    %16 = arith.addf %12, %15 : vector<8x8xf32>
    %c0_17 = arith.constant 0 : index
    %c0_18 = arith.constant 0 : index
    %c0_19 = arith.constant 0 : index
    %17 = vector.load %arg6[%c0_17, %c0_18, %c0_19] : memref<1x32x8xbf16, #tpu.memory_space<vmem>>, vector<1x32x8xbf16>
    %18 = vector.shape_cast %17 : vector<1x32x8xbf16> to vector<32x8xbf16>
    %cst_20 = arith.constant dense<0.000000e+00> : vector<8x8xf32>
    %19 = tpu.matmul %1, %18, %cst_20 {dimension_numbers = #tpu.dot_dimension_numbers<[1], [0], [0], [1], [0, 0, 1, 1], [], []>} : vector<8x32xbf16>, vector<32x8xbf16>, vector<8x8xf32> -> vector<8x8xf32>
    %c0_21 = arith.constant 0 : index
    %c0_22 = arith.constant 0 : index
    %c0_23 = arith.constant 0 : index
    %20 = vector.load %arg9[%c0_21, %c0_22, %c0_23] : memref<1x1x8xf32, #tpu.memory_space<vmem>>, vector<1x1x8xf32>
    %21 = vector.shape_cast %20 : vector<1x1x8xf32> to vector<1x8xf32>
    %22 = vector.broadcast %21 : vector<1x8xf32> to vector<8x8xf32>
    %23 = arith.addf %19, %22 : vector<8x8xf32>
    %24 = arith.truncf %9 : vector<8x8xf32> to vector<8x8xbf16>
    %25 = arith.truncf %16 : vector<8x8xf32> to vector<8x8xbf16>
    %cst_24 = arith.constant dense<0.000000e+00> : vector<8x8xf32>
    %26 = tpu.matmul %24, %25, %cst_24 {dimension_numbers = #tpu.dot_dimension_numbers<[1], [1], [0], [0], [0, 0, 1, 0], [], []>} : vector<8x8xbf16>, vector<8x8xbf16>, vector<8x8xf32> -> vector<8x8xf32>
    %cst_25 = arith.constant 0.353553385 : f32
    %27 = vector.broadcast %cst_25 : f32 to vector<8x8xf32>
    %28 = arith.mulf %26, %27 : vector<8x8xf32>
    %29 = arith.addf %28, %2 : vector<8x8xf32>
    %cst_26 = arith.constant dense<0xFF800000> : vector<8xf32>
    %30 = vector.multi_reduction <maximumf>, %29, %cst_26 [1] : vector<8x8xf32> to vector<8xf32>
    %31 = vector.shape_cast %30 : vector<8xf32> to vector<8x1xf32>
    %32 = vector.broadcast %31 : vector<8x1xf32> to vector<8x8xf32>
    %33 = arith.subf %29, %32 : vector<8x8xf32>
    %34 = math.exp %33 : vector<8x8xf32>
    %cst_27 = arith.constant dense<0.000000e+00> : vector<8xf32>
    %35 = vector.multi_reduction <add>, %34, %cst_27 [1] : vector<8x8xf32> to vector<8xf32>
    %36 = vector.shape_cast %35 : vector<8xf32> to vector<8x1xf32>
    %37 = tpu.reciprocal %36 {approx = true} : vector<8x1xf32> -> vector<8x1xf32>
    %38 = vector.broadcast %37 : vector<8x1xf32> to vector<8x8xf32>
    %39 = arith.mulf %34, %38 : vector<8x8xf32>
    %40 = arith.truncf %39 : vector<8x8xf32> to vector<8x8xbf16>
    %41 = arith.truncf %23 : vector<8x8xf32> to vector<8x8xbf16>
    %cst_28 = arith.constant dense<0.000000e+00> : vector<8x8xf32>
    %42 = tpu.matmul %40, %41, %cst_28 {dimension_numbers = #tpu.dot_dimension_numbers<[1], [0], [0], [1], [0, 0, 1, 1], [], []>} : vector<8x8xbf16>, vector<8x8xbf16>, vector<8x8xf32> -> vector<8x8xf32>
    %43 = arith.truncf %42 : vector<8x8xf32> to vector<8x8xbf16>
    %c0_29 = arith.constant 0 : index
    %c0_30 = arith.constant 0 : index
    %c0_31 = arith.constant 0 : index
    %44 = vector.load %arg10[%c0_29, %c0_30, %c0_31] : memref<1x8x32xbf16, #tpu.memory_space<vmem>>, vector<1x8x32xbf16>
    %45 = vector.shape_cast %44 : vector<1x8x32xbf16> to vector<8x32xbf16>
    %cst_32 = arith.constant dense<0.000000e+00> : vector<8x32xf32>
    %46 = tpu.matmul %43, %45, %cst_32 {dimension_numbers = #tpu.dot_dimension_numbers<[1], [0], [0], [1], [0, 0, 1, 1], [], []>} : vector<8x8xbf16>, vector<8x32xbf16>, vector<8x32xf32> -> vector<8x32xf32>
    %c0_i32 = arith.constant 0 : i32
    %47 = arith.cmpi eq, %arg1, %c0_i32 : i32
    %48 = arith.extui %47 : i1 to i32
    %c0_i32_33 = arith.constant 0 : i32
    %49 = arith.cmpi ne, %48, %c0_i32_33 : i32
    scf.if %49 {
      %c0_36 = arith.constant 0 : index
      %c0_37 = arith.constant 0 : index
      %53 = vector.load %arg11[%c0_36, %c0_37] : memref<1x32xf32, #tpu.memory_space<vmem>>, vector<1x32xf32>
      %54 = vector.broadcast %53 : vector<1x32xf32> to vector<8x32xf32>
      %55 = arith.addf %46, %54 : vector<8x32xf32>
      %c0_38 = arith.constant 0 : index
      %c0_39 = arith.constant 0 : index
      %c0_40 = arith.constant 0 : index
      %56 = vector.load %arg12[%c0_38, %c0_39, %c0_40] : memref<1x8x32xf32, #tpu.memory_space<vmem>>, vector<1x8x32xf32>
      %57 = vector.shape_cast %56 : vector<1x8x32xf32> to vector<8x32xf32>
      %58 = vector.shape_cast %55 : vector<8x32xf32> to vector<1x8x32xf32>
      tpu.vector_store %arg12[%c0_38, %c0_39, %c0_40], %58 {strides = array<i32>} : memref<1x8x32xf32, #tpu.memory_space<vmem>>, vector<1x8x32xf32>,
    } else {
    }
    %c0_i32_34 = arith.constant 0 : i32
    %50 = arith.cmpi sgt, %arg1, %c0_i32_34 : i32
    %51 = arith.extui %50 : i1 to i32
    %c0_i32_35 = arith.constant 0 : i32
    %52 = arith.cmpi ne, %51, %c0_i32_35 : i32
    scf.if %52 {
      %c0_36 = arith.constant 0 : index
      %c0_37 = arith.constant 0 : index
      %c0_38 = arith.constant 0 : index
      %53 = vector.load %arg12[%c0_36, %c0_37, %c0_38] : memref<1x8x32xf32, #tpu.memory_space<vmem>>, vector<1x8x32xf32>
      %54 = vector.shape_cast %53 : vector<1x8x32xf32> to vector<8x32xf32>
      %55 = arith.addf %54, %46 : vector<8x32xf32>
      %c0_39 = arith.constant 0 : index
      %c0_40 = arith.constant 0 : index
      %c0_41 = arith.constant 0 : index
      %56 = vector.load %arg12[%c0_39, %c0_40, %c0_41] : memref<1x8x32xf32, #tpu.memory_space<vmem>>, vector<1x8x32xf32>
      %57 = vector.shape_cast %56 : vector<1x8x32xf32> to vector<8x32xf32>
      %58 = vector.shape_cast %55 : vector<8x32xf32> to vector<1x8x32xf32>
      tpu.vector_store %arg12[%c0_39, %c0_40, %c0_41], %58 {strides = array<i32>} : memref<1x8x32xf32, #tpu.memory_space<vmem>>, vector<1x8x32xf32>,
    } else {
    }
    return
  }
  func.func @transform_0(%arg0: i32, %arg1: i32) -> (i32, i32, i32) {
    %c0_i32 = arith.constant 0 : i32
    %c0_i32_0 = arith.constant 0 : i32
    %c0_i32_1 = arith.constant 0 : i32
    return %arg0, %c0_i32, %c0_i32_0 : i32, i32, i32
  }
  func.func @transform_1(%arg0: i32, %arg1: i32) -> (i32, i32) {
    %c0_i32 = arith.constant 0 : i32
    %c0_i32_0 = arith.constant 0 : i32
    %c0_i32_1 = arith.constant 0 : i32
    return %c0_i32, %c0_i32_0 : i32, i32
  }
  func.func @transform_2(%arg0: i32, %arg1: i32) -> (i32, i32, i32) {
    %c0_i32 = arith.constant 0 : i32
    %c0_i32_0 = arith.constant 0 : i32
    %c0_i32_1 = arith.constant 0 : i32
    return %arg1, %c0_i32, %c0_i32_0 : i32, i32, i32
  }
  func.func @transform_3(%arg0: i32, %arg1: i32) -> (i32, i32, i32) {
    %c0_i32 = arith.constant 0 : i32
    %c0_i32_0 = arith.constant 0 : i32
    %c0_i32_1 = arith.constant 0 : i32
    return %arg1, %c0_i32, %c0_i32_0 : i32, i32, i32
  }
  func.func @transform_4(%arg0: i32, %arg1: i32) -> (i32, i32, i32) {
    %c0_i32 = arith.constant 0 : i32
    %c0_i32_0 = arith.constant 0 : i32
    %c0_i32_1 = arith.constant 0 : i32
    return %arg1, %c0_i32, %c0_i32_0 : i32, i32, i32
  }
  func.func @transform_5(%arg0: i32, %arg1: i32) -> (i32, i32, i32) {
    %c0_i32 = arith.constant 0 : i32
    %c0_i32_0 = arith.constant 0 : i32
    %c0_i32_1 = arith.constant 0 : i32
    return %arg1, %c0_i32, %c0_i32_0 : i32, i32, i32
  }
  func.func @transform_6(%arg0: i32, %arg1: i32) -> (i32, i32, i32) {
    %c0_i32 = arith.constant 0 : i32
    %c0_i32_0 = arith.constant 0 : i32
    %c0_i32_1 = arith.constant 0 : i32
    return %arg1, %c0_i32, %c0_i32_0 : i32, i32, i32
  }
  func.func @transform_7(%arg0: i32, %arg1: i32) -> (i32, i32, i32) {
    %c0_i32 = arith.constant 0 : i32
    %c0_i32_0 = arith.constant 0 : i32
    %c0_i32_1 = arith.constant 0 : i32
    return %arg1, %c0_i32, %c0_i32_0 : i32, i32, i32
  }
  func.func @transform_8(%arg0: i32, %arg1: i32) -> (i32, i32, i32) {
    %c0_i32 = arith.constant 0 : i32
    %c0_i32_0 = arith.constant 0 : i32
    %c0_i32_1 = arith.constant 0 : i32
    return %arg1, %c0_i32, %c0_i32_0 : i32, i32, i32
  }
  func.func @transform_9(%arg0: i32, %arg1: i32) -> (i32, i32) {
    %c0_i32 = arith.constant 0 : i32
    %c0_i32_0 = arith.constant 0 : i32
    %c0_i32_1 = arith.constant 0 : i32
    return %c0_i32, %c0_i32_0 : i32, i32
  }
  func.func @transform_10(%arg0: i32, %arg1: i32) -> (i32, i32, i32) {
    %c0_i32 = arith.constant 0 : i32
    %c0_i32_0 = arith.constant 0 : i32
    %c0_i32_1 = arith.constant 0 : i32
    return %arg0, %c0_i32, %c0_i32_0 : i32, i32, i32
  }
}

</mosaic_0001>

<llo_original>
// kernel: tpu_custom_call.1
$region0: #{tpu_custom_call.1}
  #allocation0 [shape = 'u32[]', space=smem, size = 0x4, offset = 0x4, fixed_abs, tag = 'smem constant byte address 0x4 - core index']
  #allocation1 [shape = 'u32[72,128]{1,0:T(1,128)}', space=vmem, size = 0x9000, scoped, tag = 'internal scratch']
  %s0 = inlined_call_operand.vmem [shape: bf16[2,8,32], index: 0, kind: input, shape index: {}]
  %s1 = inlined_call_operand.vmem [shape: f32[8,8], index: 1, kind: input, shape index: {}]
  %s2 = inlined_call_operand.vmem [shape: bf16[4,32,8], index: 2, kind: input, shape index: {}]
  %s3 = inlined_call_operand.vmem [shape: bf16[4,32,8], index: 3, kind: input, shape index: {}]
  %s4 = inlined_call_operand.vmem [shape: bf16[4,32,8], index: 4, kind: input, shape index: {}]
  %s5 = inlined_call_operand.vmem [shape: f32[4,1,8], index: 5, kind: input, shape index: {}]
  %s6 = inlined_call_operand.vmem [shape: f32[4,1,8], index: 6, kind: input, shape index: {}]
  %s7 = inlined_call_operand.vmem [shape: f32[4,1,8], index: 7, kind: input, shape index: {}]
  %s8 = inlined_call_operand.vmem [shape: bf16[4,8,32], index: 8, kind: input, shape index: {}]
  %s9 = inlined_call_operand.vmem [shape: f32[1,32], index: 9, kind: input, shape index: {}]
  %s10 = inlined_call_operand.hbm [shape: f32[2,8,32], index: 10, kind: output, shape index: {}]
  %s11 = sld [smem:[#allocation0]]
  $region81: #{tpu_custom_call.1} parent=0
    _
  %s13 = ssub.s32 1, %s11
  %s14 = scalar_select 0, %s13, %s11
  $region1: #{tpu_custom_call.1} parent=0
    #allocation2 [shape = 'u8[8192]{0}', space=vmem, size = 0x2000, scoped, tag = 'output window, operand 0']
    #allocation3 [shape = 's32[2]{0}', space=sflag, size = 0x8, scoped, tag = 'scoped memory for tpu_custom_call.1']
    %15 = vsyncpa [#allocation3], 0
    %s16 = scalar_lea.sflag [#allocation3], 1
    %17 = vsyncpa %s16, 0
    loop: start=0, step=1, limit=10
    $region2: #{tpu_custom_call.1} parent=1 // loop_pre_header
      _
    $region3: #{tpu_custom_call.1} parent=1 // loop_header
      %s19 = sphi 0, %s23
      %p20 = scmp.ge.s32.totalorder %s19, 10
      %s26 = sphi 0, %s38
      %s27 = sphi 0, %s34
      %s28 = sphi 0, %s26
      %s29 = sphi 0, %s27
      %s30 = sphi 0, %s28
      %s31 = sphi 0, %s29
      %s41 = sphi 0, %s43
      %s44 = sphi 0, %s41
      %s45 = sphi 0, %s44
      %s61 = sphi 0, %s45
      %s65 = sphi 0, %s65
      %s67 = sphi 0, %s65
      %s68 = sphi 0, %s67
      %s82 = sphi 0, %s68
      %s88 = sphi 0, %s90
      %s91 = sphi 0, %s88
      %s92 = sphi 0, %s91
      %s108 = sphi 0, %s92
      %s114 = sphi 0, %s116
      %s117 = sphi 0, %s114
      %s118 = sphi 0, %s117
      %s134 = sphi 0, %s118
      %s140 = sphi 0, %s142
      %s143 = sphi 0, %s140
      %s144 = sphi 0, %s143
      %s160 = sphi 0, %s144
      %s166 = sphi 0, %s168
      %s169 = sphi 0, %s166
      %s170 = sphi 0, %s169
      %s186 = sphi 0, %s170
      %s192 = sphi 0, %s194
      %s195 = sphi 0, %s192
      %s196 = sphi 0, %s195
      %s212 = sphi 0, %s196
      %s218 = sphi 0, %s220
      %s221 = sphi 0, %s218
      %s222 = sphi 0, %s221
      %s238 = sphi 0, %s222
      %s244 = sphi 0, %s246
      %s247 = sphi 0, %s244
      %s248 = sphi 0, %s247
      %s264 = sphi 0, %s248
      %s268 = sphi 0, %s268
      %s270 = sphi 0, %s268
      %s271 = sphi 0, %s270
      %s285 = sphi 0, %s271
      %s291 = sphi 0, %s293
      %s294 = sphi 0, %s291
      %s295 = sphi 0, %s294
      %s311 = sphi 0, %s295
    $region4: #{tpu_custom_call.1} parent=1 // loop_header_branch
      %22 = sbr.rel (%p20) target = $region8
    $region5: #{tpu_custom_call.1} parent=1 // loop_body
      %s24 = ssub.s32 %s19, 1
      %s25 = ssub.s32 %s19, 2
      %s32 = sadd.s32 1, %s27
      %p33 = scmp.ge.s32.totalorder %s32, 4
      %s34 = scalar_select %p33, 0, %s32
      %s35 = sadd.s32 1, %s26
      %s36 = scalar_select %p33, %s35, %s26
      %p37 = scmp.ge.s32.totalorder %s36, 2
      %s38 = scalar_select %p37, 0, %s36
      %s39 = ssub.s32 %s26, %s38
      %p40 = scmp.eq.s32.totalorder %s39, 0
      %s42 = sadd.s32 %s41, 1
      %s43 = scalar_select %p40, %s41, %s42
      %p46 = pneg %p40
      %p47 = scmp.eq.s32.totalorder %s19, 7
      %p48 = por %p46, %p47
      %p49 = scmp.ne.s32.totalorder %s41, %s44
      %p50 = scmp.eq.s32.totalorder %s19, 0
      %p51 = por %p49, %p50
      %p52 = scmp.ne.s32.totalorder %s41, %s44
      %p53 = scmp.eq.s32.totalorder %s24, 7
      %p54 = por %p52, %p53
      %p55 = scmp.ne.s32.totalorder %s44, %s45
      %p56 = scmp.eq.s32.totalorder %s24, 0
      %p57 = por %p55, %p56
      %p58 = scmp.ne.s32.totalorder %s44, %s45
      %p59 = scmp.eq.s32.totalorder %s25, 7
      %p60 = por %p58, %p59
      %p62 = scmp.ne.s32.totalorder %s45, %s61
      %p63 = scmp.eq.s32.totalorder %s25, 0
      %p64 = por %p62, %p63
      %s66 = sadd.s32 %s65, 1
      %p69 = scmp.eq.s32.totalorder %s19, 7
      %p70 = scmp.ne.s32.totalorder %s65, %s67
      %p71 = scmp.eq.s32.totalorder %s19, 0
      %p72 = por %p70, %p71
      %p73 = scmp.ne.s32.totalorder %s65, %s67
      %p74 = scmp.eq.s32.totalorder %s24, 7
      %p75 = por %p73, %p74
      %p76 = scmp.ne.s32.totalorder %s67, %s68
      %p77 = scmp.eq.s32.totalorder %s24, 0
      %p78 = por %p76, %p77
      %p79 = scmp.ne.s32.totalorder %s67, %s68
      %p80 = scmp.eq.s32.totalorder %s25, 7
      %p81 = por %p79, %p80
      %p83 = scmp.ne.s32.totalorder %s68, %s82
      %p84 = scmp.eq.s32.totalorder %s25, 0
      %p85 = por %p83, %p84
      %s86 = ssub.s32 %s27, %s34
      %p87 = scmp.eq.s32.totalorder %s86, 0
      %s89 = sadd.s32 %s88, 1
      %s90 = scalar_select %p87, %s88, %s89
      %p93 = pneg %p87
      %p94 = scmp.eq.s32.totalorder %s19, 7
      %p95 = por %p93, %p94
      %p96 = scmp.ne.s32.totalorder %s88, %s91
      %p97 = scmp.eq.s32.totalorder %s19, 0
      %p98 = por %p96, %p97
      %p99 = scmp.ne.s32.totalorder %s88, %s91
      %p100 = scmp.eq.s32.totalorder %s24, 7
      %p101 = por %p99, %p100
      %p102 = scmp.ne.s32.totalorder %s91, %s92
      %p103 = scmp.eq.s32.totalorder %s24, 0
      %p104 = por %p102, %p103
      %p105 = scmp.ne.s32.totalorder %s91, %s92
      %p106 = scmp.eq.s32.totalorder %s25, 7
      %p107 = por %p105, %p106
      %p109 = scmp.ne.s32.totalorder %s92, %s108
      %p110 = scmp.eq.s32.totalorder %s25, 0
      %p111 = por %p109, %p110
      %s112 = ssub.s32 %s27, %s34
      %p113 = scmp.eq.s32.totalorder %s112, 0
      %s115 = sadd.s32 %s114, 1
      %s116 = scalar_select %p113, %s114, %s115
      %p119 = pneg %p113
      %p120 = scmp.eq.s32.totalorder %s19, 7
      %p121 = por %p119, %p120
      %p122 = scmp.ne.s32.totalorder %s114, %s117
      %p123 = scmp.eq.s32.totalorder %s19, 0
      %p124 = por %p122, %p123
      %p125 = scmp.ne.s32.totalorder %s114, %s117
      %p126 = scmp.eq.s32.totalorder %s24, 7
      %p127 = por %p125, %p126
      %p128 = scmp.ne.s32.totalorder %s117, %s118
      %p129 = scmp.eq.s32.totalorder %s24, 0
      %p130 = por %p128, %p129
      %p131 = scmp.ne.s32.totalorder %s117, %s118
      %p132 = scmp.eq.s32.totalorder %s25, 7
      %p133 = por %p131, %p132
      %p135 = scmp.ne.s32.totalorder %s118, %s134
      %p136 = scmp.eq.s32.totalorder %s25, 0
      %p137 = por %p135, %p136
      %s138 = ssub.s32 %s27, %s34
      %p139 = scmp.eq.s32.totalorder %s138, 0
      %s141 = sadd.s32 %s140, 1
      %s142 = scalar_select %p139, %s140, %s141
      %p145 = pneg %p139
      %p146 = scmp.eq.s32.totalorder %s19, 7
      %p147 = por %p145, %p146
      %p148 = scmp.ne.s32.totalorder %s140, %s143
      %p149 = scmp.eq.s32.totalorder %s19, 0
      %p150 = por %p148, %p149
      %p151 = scmp.ne.s32.totalorder %s140, %s143
      %p152 = scmp.eq.s32.totalorder %s24, 7
      %p153 = por %p151, %p152
      %p154 = scmp.ne.s32.totalorder %s143, %s144
      %p155 = scmp.eq.s32.totalorder %s24, 0
      %p156 = por %p154, %p155
      %p157 = scmp.ne.s32.totalorder %s143, %s144
      %p158 = scmp.eq.s32.totalorder %s25, 7
      %p159 = por %p157, %p158
      %p161 = scmp.ne.s32.totalorder %s144, %s160
      %p162 = scmp.eq.s32.totalorder %s25, 0
      %p163 = por %p161, %p162
      %s164 = ssub.s32 %s27, %s34
      %p165 = scmp.eq.s32.totalorder %s164, 0
      %s167 = sadd.s32 %s166, 1
      %s168 = scalar_select %p165, %s166, %s167
      %p171 = pneg %p165
      %p172 = scmp.eq.s32.totalorder %s19, 7
      %p173 = por %p171, %p172
      %p174 = scmp.ne.s32.totalorder %s166, %s169
      %p175 = scmp.eq.s32.totalorder %s19, 0
      %p176 = por %p174, %p175
      %p177 = scmp.ne.s32.totalorder %s166, %s169
      %p178 = scmp.eq.s32.totalorder %s24, 7
      %p179 = por %p177, %p178
      %p180 = scmp.ne.s32.totalorder %s169, %s170
      %p181 = scmp.eq.s32.totalorder %s24, 0
      %p182 = por %p180, %p181
      %p183 = scmp.ne.s32.totalorder %s169, %s170
      %p184 = scmp.eq.s32.totalorder %s25, 7
      %p185 = por %p183, %p184
      %p187 = scmp.ne.s32.totalorder %s170, %s186
      %p188 = scmp.eq.s32.totalorder %s25, 0
      %p189 = por %p187, %p188
      %s190 = ssub.s32 %s27, %s34
      %p191 = scmp.eq.s32.totalorder %s190, 0
      %s193 = sadd.s32 %s192, 1
      %s194 = scalar_select %p191, %s192, %s193
      %p197 = pneg %p191
      %p198 = scmp.eq.s32.totalorder %s19, 7
      %p199 = por %p197, %p198
      %p200 = scmp.ne.s32.totalorder %s192, %s195
      %p201 = scmp.eq.s32.totalorder %s19, 0
      %p202 = por %p200, %p201
      %p203 = scmp.ne.s32.totalorder %s192, %s195
      %p204 = scmp.eq.s32.totalorder %s24, 7
      %p205 = por %p203, %p204
      %p206 = scmp.ne.s32.totalorder %s195, %s196
      %p207 = scmp.eq.s32.totalorder %s24, 0
      %p208 = por %p206, %p207
      %p209 = scmp.ne.s32.totalorder %s195, %s196
      %p210 = scmp.eq.s32.totalorder %s25, 7
      %p211 = por %p209, %p210
      %p213 = scmp.ne.s32.totalorder %s196, %s212
      %p214 = scmp.eq.s32.totalorder %s25, 0
      %p215 = por %p213, %p214
      %s216 = ssub.s32 %s27, %s34
      %p217 = scmp.eq.s32.totalorder %s216, 0
      %s219 = sadd.s32 %s218, 1
      %s220 = scalar_select %p217, %s218, %s219
      %p223 = pneg %p217
      %p224 = scmp.eq.s32.totalorder %s19, 7
      %p225 = por %p223, %p224
      %p226 = scmp.ne.s32.totalorder %s218, %s221
      %p227 = scmp.eq.s32.totalorder %s19, 0
      %p228 = por %p226, %p227
      %p229 = scmp.ne.s32.totalorder %s218, %s221
      %p230 = scmp.eq.s32.totalorder %s24, 7
      %p231 = por %p229, %p230
      %p232 = scmp.ne.s32.totalorder %s221, %s222
      %p233 = scmp.eq.s32.totalorder %s24, 0
      %p234 = por %p232, %p233
      %p235 = scmp.ne.s32.totalorder %s221, %s222
      %p236 = scmp.eq.s32.totalorder %s25, 7
      %p237 = por %p235, %p236
      %p239 = scmp.ne.s32.totalorder %s222, %s238
      %p240 = scmp.eq.s32.totalorder %s25, 0
      %p241 = por %p239, %p240
      %s242 = ssub.s32 %s27, %s34
      %p243 = scmp.eq.s32.totalorder %s242, 0
      %s245 = sadd.s32 %s244, 1
      %s246 = scalar_select %p243, %s244, %s245
      %p249 = pneg %p243
      %p250 = scmp.eq.s32.totalorder %s19, 7
      %p251 = por %p249, %p250
      %p252 = scmp.ne.s32.totalorder %s244, %s247
      %p253 = scmp.eq.s32.totalorder %s19, 0
      %p254 = por %p252, %p253
      %p255 = scmp.ne.s32.totalorder %s244, %s247
      %p256 = scmp.eq.s32.totalorder %s24, 7
      %p257 = por %p255, %p256
      %p258 = scmp.ne.s32.totalorder %s247, %s248
      %p259 = scmp.eq.s32.totalorder %s24, 0
      %p260 = por %p258, %p259
      %p261 = scmp.ne.s32.totalorder %s247, %s248
      %p262 = scmp.eq.s32.totalorder %s25, 7
      %p263 = por %p261, %p262
      %p265 = scmp.ne.s32.totalorder %s248, %s264
      %p266 = scmp.eq.s32.totalorder %s25, 0
      %p267 = por %p265, %p266
      %s269 = sadd.s32 %s268, 1
      %p272 = scmp.eq.s32.totalorder %s19, 7
      %p273 = scmp.ne.s32.totalorder %s268, %s270
      %p274 = scmp.eq.s32.totalorder %s19, 0
      %p275 = por %p273, %p274
      %p276 = scmp.ne.s32.totalorder %s268, %s270
      %p277 = scmp.eq.s32.totalorder %s24, 7
      %p278 = por %p276, %p277
      %p279 = scmp.ne.s32.totalorder %s270, %s271
      %p280 = scmp.eq.s32.totalorder %s24, 0
      %p281 = por %p279, %p280
      %p282 = scmp.ne.s32.totalorder %s270, %s271
      %p283 = scmp.eq.s32.totalorder %s25, 7
      %p284 = por %p282, %p283
      %p286 = scmp.ne.s32.totalorder %s271, %s285
      %p287 = scmp.eq.s32.totalorder %s25, 0
      %p288 = por %p286, %p287
      %s289 = ssub.s32 %s26, %s38
      %p290 = scmp.eq.s32.totalorder %s289, 0
      %s292 = sadd.s32 %s291, 1
      %s293 = scalar_select %p290, %s291, %s292
      %p296 = pneg %p290
      %p297 = scmp.eq.s32.totalorder %s19, 7
      %p298 = por %p296, %p297
      %p299 = scmp.ne.s32.totalorder %s291, %s294
      %p300 = scmp.eq.s32.totalorder %s19, 0
      %p301 = por %p299, %p300
      %p302 = scmp.ne.s32.totalorder %s291, %s294
      %p303 = scmp.eq.s32.totalorder %s24, 7
      %p304 = por %p302, %p303
      %p305 = scmp.ne.s32.totalorder %s294, %s295
      %p306 = scmp.eq.s32.totalorder %s24, 0
      %p307 = por %p305, %p306
      %p308 = scmp.ne.s32.totalorder %s294, %s295
      %p309 = scmp.eq.s32.totalorder %s25, 7
      %p310 = por %p308, %p309
      %p312 = scmp.ne.s32.totalorder %s295, %s311
      %p313 = scmp.eq.s32.totalorder %s25, 0
      %p314 = por %p312, %p313
      %p315 = scmp.le.s32.totalorder 1, %s19
      %p316 = scmp.lt.s32.totalorder %s19, 9
      %p317 = pnand %p315, %p316
      %p318 = pneg %p317
      // Predicated region
      $region9: #{tpu_custom_call.1} parent=5 // pred_check
        _
      $region10: #{tpu_custom_call.1} parent=5 // pred_check_branch
        %320 = sbr.rel (%p317) target = $region12
      $region11: #{tpu_custom_call.1} parent=5 // pred_region
        %s321 = ssub.s32 %s19, 1
        // Predicated region
        $region13: #{tpu_custom_call.1} parent=11 // pred_check
          %p322 = pneg %p78
        $region14: #{tpu_custom_call.1} parent=11 // pred_check_branch
          %324 = sbr.rel (%p322) target = $region16
        $region15: #{tpu_custom_call.1} parent=11 // pred_region
          _
        $region16: #{tpu_custom_call.1} parent=11 // pred_fallthru
          _
        // Predicated region
        $region17: #{tpu_custom_call.1} parent=11 // pred_check
          %p325 = pneg %p281
        $region18: #{tpu_custom_call.1} parent=11 // pred_check_branch
          %327 = sbr.rel (%p325) target = $region20
        $region19: #{tpu_custom_call.1} parent=11 // pred_region
          _
        $region20: #{tpu_custom_call.1} parent=11 // pred_fallthru
          _
      $region12: #{tpu_custom_call.1} parent=5 // pred_fallthru
        _
      %p328 = scmp.lt.s32.totalorder %s19, 8
      // Predicated region
      $region21: #{tpu_custom_call.1} parent=5 // pred_check
        %p329 = pneg %p328
      $region22: #{tpu_custom_call.1} parent=5 // pred_check_branch
        %331 = sbr.rel (%p329) target = $region24
      $region23: #{tpu_custom_call.1} parent=5 // pred_region
        // Predicated region
        $region25: #{tpu_custom_call.1} parent=23 // pred_check
          %p332 = pneg %p51
        $region26: #{tpu_custom_call.1} parent=23 // pred_check_branch
          %334 = sbr.rel (%p332) target = $region28
        $region27: #{tpu_custom_call.1} parent=23 // pred_region
          %p335 = scmp.lt.s32.totalorder %s26, 1
          %s336 = scalar_select %p335, %s26, 1
          %s337 = smul.addr %s336, 4
          %s338 = scalar_lea.vmem %s0, %s337
        $region28: #{tpu_custom_call.1} parent=23 // pred_fallthru
          _
        // Predicated region
        $region29: #{tpu_custom_call.1} parent=23 // pred_check
          %p339 = pneg %p98
        $region30: #{tpu_custom_call.1} parent=23 // pred_check_branch
          %341 = sbr.rel (%p339) target = $region32
        $region31: #{tpu_custom_call.1} parent=23 // pred_region
          %p342 = scmp.lt.s32.totalorder %s27, 3
          %s343 = scalar_select %p342, %s27, 3
          %s344 = smul.addr %s343, 4
          %s345 = smul.addr %s344, 4
          %s346 = scalar_lea.vmem %s2, %s345
        $region32: #{tpu_custom_call.1} parent=23 // pred_fallthru
          _
        // Predicated region
        $region33: #{tpu_custom_call.1} parent=23 // pred_check
          %p347 = pneg %p124
        $region34: #{tpu_custom_call.1} parent=23 // pred_check_branch
          %349 = sbr.rel (%p347) target = $region36
        $region35: #{tpu_custom_call.1} parent=23 // pred_region
          %p350 = scmp.lt.s32.totalorder %s27, 3
          %s351 = scalar_select %p350, %s27, 3
          %s352 = smul.addr %s351, 4
          %s353 = smul.addr %s352, 4
          %s354 = scalar_lea.vmem %s3, %s353
        $region36: #{tpu_custom_call.1} parent=23 // pred_fallthru
          _
        // Predicated region
        $region37: #{tpu_custom_call.1} parent=23 // pred_check
          %p355 = pneg %p150
        $region38: #{tpu_custom_call.1} parent=23 // pred_check_branch
          %357 = sbr.rel (%p355) target = $region40
        $region39: #{tpu_custom_call.1} parent=23 // pred_region
          %p358 = scmp.lt.s32.totalorder %s27, 3
          %s359 = scalar_select %p358, %s27, 3
          %s360 = smul.addr %s359, 4
          %s361 = smul.addr %s360, 4
          %s362 = scalar_lea.vmem %s4, %s361
        $region40: #{tpu_custom_call.1} parent=23 // pred_fallthru
          _
        // Predicated region
        $region41: #{tpu_custom_call.1} parent=23 // pred_check
          %p363 = pneg %p176
        $region42: #{tpu_custom_call.1} parent=23 // pred_check_branch
          %365 = sbr.rel (%p363) target = $region44
        $region43: #{tpu_custom_call.1} parent=23 // pred_region
          %p366 = scmp.lt.s32.totalorder %s27, 3
          %s367 = scalar_select %p366, %s27, 3
          %s368 = scalar_lea.vmem %s5, %s367
        $region44: #{tpu_custom_call.1} parent=23 // pred_fallthru
          _
        // Predicated region
        $region45: #{tpu_custom_call.1} parent=23 // pred_check
          %p369 = pneg %p202
        $region46: #{tpu_custom_call.1} parent=23 // pred_check_branch
          %371 = sbr.rel (%p369) target = $region48
        $region47: #{tpu_custom_call.1} parent=23 // pred_region
          %p372 = scmp.lt.s32.totalorder %s27, 3
          %s373 = scalar_select %p372, %s27, 3
          %s374 = scalar_lea.vmem %s6, %s373
        $region48: #{tpu_custom_call.1} parent=23 // pred_fallthru
          _
        // Predicated region
        $region49: #{tpu_custom_call.1} parent=23 // pred_check
          %p375 = pneg %p228
        $region50: #{tpu_custom_call.1} parent=23 // pred_check_branch
          %377 = sbr.rel (%p375) target = $region52
        $region51: #{tpu_custom_call.1} parent=23 // pred_region
          %p378 = scmp.lt.s32.totalorder %s27, 3
          %s379 = scalar_select %p378, %s27, 3
          %s380 = scalar_lea.vmem %s7, %s379
        $region52: #{tpu_custom_call.1} parent=23 // pred_fallthru
          _
        // Predicated region
        $region53: #{tpu_custom_call.1} parent=23 // pred_check
          %p381 = pneg %p254
        $region54: #{tpu_custom_call.1} parent=23 // pred_check_branch
          %383 = sbr.rel (%p381) target = $region56
        $region55: #{tpu_custom_call.1} parent=23 // pred_region
          %p384 = scmp.lt.s32.totalorder %s27, 3
          %s385 = scalar_select %p384, %s27, 3
          %s386 = smul.addr %s385, 4
          %s387 = scalar_lea.vmem %s8, %s386
        $region56: #{tpu_custom_call.1} parent=23 // pred_fallthru
          _
      $region24: #{tpu_custom_call.1} parent=5 // pred_fallthru
        _
      %p388 = scmp.le.s32.totalorder 1, %s19
      %p389 = scmp.lt.s32.totalorder %s19, 9
      %p390 = pnand %p388, %p389
      %p391 = pneg %p390
      // Predicated region
      $region57: #{tpu_custom_call.1} parent=5 // pred_check
        _
      $region58: #{tpu_custom_call.1} parent=5 // pred_check_branch
        %393 = sbr.rel (%p390) target = $region60
      $region59: #{tpu_custom_call.1} parent=5 // pred_region
        %s394 = ssub.s32 %s19, 1
        %p395 = scmp.lt.s32.totalorder %s28, 1
        %s396 = scalar_select %p395, %s28, 1
        %s397 = smul.addr %s396, 4
        %s398 = scalar_lea.vmem %s0, %s397
        %p399 = pneg %p57
        %p400 = pneg %p54
        %p401 = pneg %p78
        %p402 = pneg %p75
        %p403 = scmp.lt.s32.totalorder %s29, 3
        %s404 = scalar_select %p403, %s29, 3
        %s405 = smul.addr %s404, 4
        %s406 = smul.addr %s405, 4
        %s407 = scalar_lea.vmem %s2, %s406
        %p408 = pneg %p104
        %p409 = pneg %p101
        %p410 = scmp.lt.s32.totalorder %s29, 3
        %s411 = scalar_select %p410, %s29, 3
        %s412 = smul.addr %s411, 4
        %s413 = smul.addr %s412, 4
        %s414 = scalar_lea.vmem %s3, %s413
        %p415 = pneg %p130
        %p416 = pneg %p127
        %p417 = scmp.lt.s32.totalorder %s29, 3
        %s418 = scalar_select %p417, %s29, 3
        %s419 = smul.addr %s418, 4
        %s420 = smul.addr %s419, 4
        %s421 = scalar_lea.vmem %s4, %s420
        %p422 = pneg %p156
        %p423 = pneg %p153
        %p424 = scmp.lt.s32.totalorder %s29, 3
        %s425 = scalar_select %p424, %s29, 3
        %s426 = scalar_lea.vmem %s5, %s425
        %p427 = pneg %p182
        %p428 = pneg %p179
        %p429 = scmp.lt.s32.totalorder %s29, 3
        %s430 = scalar_select %p429, %s29, 3
        %s431 = scalar_lea.vmem %s6, %s430
        %p432 = pneg %p208
        %p433 = pneg %p205
        %p434 = scmp.lt.s32.totalorder %s29, 3
        %s435 = scalar_select %p434, %s29, 3
        %s436 = scalar_lea.vmem %s7, %s435
        %p437 = pneg %p234
        %p438 = pneg %p231
        %p439 = scmp.lt.s32.totalorder %s29, 3
        %s440 = scalar_select %p439, %s29, 3
        %s441 = smul.addr %s440, 4
        %s442 = scalar_lea.vmem %s8, %s441
        %p443 = pneg %p260
        %p444 = pneg %p257
        %p445 = pneg %p281
        %p446 = pneg %p278
        %p447 = pneg %p307
        %p448 = pneg %p304
        %s449 = sand.u32 %s294, 1
        %s450 = scalar_lea.sflag [#allocation3], %s449
        %s451 = sand.u32 %s294, 1
        %s452 = smul.addr %s451, 8
        %s453 = scalar_lea.vmem [#allocation2], %s452
        %p454 = scmp.lt.s32.totalorder %s28, 1
        %s455 = scalar_select %p454, %s28, 1
        %s456 = smul.addr %s455, 4
        %s457 = scalar_lea.vmem %s0, %s456
        %p458 = scmp.lt.s32.totalorder %s29, 3
        %s459 = scalar_select %p458, %s29, 3
        %s460 = smul.addr %s459, 4
        %s461 = smul.addr %s460, 4
        %s462 = scalar_lea.vmem %s2, %s461
        %p463 = scmp.lt.s32.totalorder %s29, 3
        %s464 = scalar_select %p463, %s29, 3
        %s465 = smul.addr %s464, 4
        %s466 = smul.addr %s465, 4
        %s467 = scalar_lea.vmem %s3, %s466
        %p468 = scmp.lt.s32.totalorder %s29, 3
        %s469 = scalar_select %p468, %s29, 3
        %s470 = smul.addr %s469, 4
        %s471 = smul.addr %s470, 4
        %s472 = scalar_lea.vmem %s4, %s471
        %p473 = scmp.lt.s32.totalorder %s29, 3
        %s474 = scalar_select %p473, %s29, 3
        %s475 = scalar_lea.vmem %s5, %s474
        %p476 = scmp.lt.s32.totalorder %s29, 3
        %s477 = scalar_select %p476, %s29, 3
        %s478 = scalar_lea.vmem %s6, %s477
        %p479 = scmp.lt.s32.totalorder %s29, 3
        %s480 = scalar_select %p479, %s29, 3
        %s481 = scalar_lea.vmem %s7, %s480
        %p482 = scmp.lt.s32.totalorder %s29, 3
        %s483 = scalar_select %p482, %s29, 3
        %s484 = smul.addr %s483, 4
        %s485 = scalar_lea.vmem %s8, %s484
        %v487 = vld [vmem:[%s457] sm:$0xf]
        %v488 = vld [vmem:[%s1] sm:$0xff]
        %v489 = vld [vmem:[%s462] sm:$0xf]
        %v490 = vld [vmem:[%s462 + $0x4] sm:$0xf]
        %v491 = vld [vmem:[%s462 + $0x8] sm:$0xf]
        %v492 = vld [vmem:[%s462 + $0xc] sm:$0xf]
        %v493 = vld [vmem:[%s475] sm:$0x1]
        %v495 = vperm.slane %v493, 0
        %v501 = vunpack.c.l.b16 %v489
        %v502 = vunpack.c.l.b16 %v490
        %v503 = vunpack.c.l.b16 %v491
        %v504 = vunpack.c.l.b16 %v492
        %v505 = vpack.c.b16 %v502, %v501
        %v506 = vpack.c.b16 %v504, %v503
        %vm509 = vcmask 261120
        %v511 = vsel %vm509, %v487, 0
        %513 = vmatpush.bf16.msra.mxu0 0
        %514 = vmatpush.bf16.msra.mxu0 0
        %515 = vmatpush.bf16.msra.mxu0 0
        %516 = vmatpush.bf16.msra.mxu0 0
        %517 = vmatpush.bf16.msra.mxu0 0
        %518 = vmatpush.bf16.msra.mxu0 0
        %519 = vmatpush.bf16.msra.mxu0 %v506
        %520 = vmatpush.bf16.msra.mxu0 %v505
        %521 = vmatmul.bf16.gmra.mxu0 %v511
        %v522 = vpop.f32.mrf.mxu0
        %v523 = vadd.f32 %v495, %v522
        %v524 = vpop.f32.mrf.mxu0
        %525 = vdwg.mxu0
        %v526 = vld [vmem:[%s467] sm:$0xf]
        %v527 = vld [vmem:[%s467 + $0x4] sm:$0xf]
        %v528 = vld [vmem:[%s467 + $0x8] sm:$0xf]
        %v529 = vld [vmem:[%s467 + $0xc] sm:$0xf]
        %v530 = vld [vmem:[%s478] sm:$0x1]
        %v532 = vperm.slane %v530, 0
        %v538 = vunpack.c.l.b16 %v526
        %v539 = vunpack.c.l.b16 %v527
        %v540 = vunpack.c.l.b16 %v528
        %v541 = vunpack.c.l.b16 %v529
        %v542 = vpack.c.b16 %v539, %v538
        %v543 = vpack.c.b16 %v541, %v540
        %546 = vmatpush.bf16.msra.mxu0 0
        %547 = vmatpush.bf16.msra.mxu0 0
        %548 = vmatpush.bf16.msra.mxu0 0
        %549 = vmatpush.bf16.msra.mxu0 0
        %550 = vmatpush.bf16.msra.mxu0 0
        %551 = vmatpush.bf16.msra.mxu0 0
        %552 = vmatpush.bf16.msra.mxu0 %v543
        %553 = vmatpush.bf16.msra.mxu0 %v542
        %554 = vmatmul.bf16.gmra.mxu0 %v511
        %v555 = vpop.f32.mrf.mxu0
        %v556 = vadd.f32 %v532, %v555
        %v557 = vpop.f32.mrf.mxu0
        %558 = vdwg.mxu0
        %v559 = vld [vmem:[%s472] sm:$0xf]
        %v560 = vld [vmem:[%s472 + $0x4] sm:$0xf]
        %v561 = vld [vmem:[%s472 + $0x8] sm:$0xf]
        %v562 = vld [vmem:[%s472 + $0xc] sm:$0xf]
        %v563 = vld [vmem:[%s481] sm:$0x1]
        %v565 = vperm.slane %v563, 0
        %v571 = vunpack.c.l.b16 %v559
        %v572 = vunpack.c.l.b16 %v560
        %v573 = vunpack.c.l.b16 %v561
        %v574 = vunpack.c.l.b16 %v562
        %v575 = vpack.c.b16 %v572, %v571
        %v576 = vpack.c.b16 %v574, %v573
        %579 = vmatpush.bf16.msra.mxu0 0
        %580 = vmatpush.bf16.msra.mxu0 0
        %581 = vmatpush.bf16.msra.mxu0 0
        %582 = vmatpush.bf16.msra.mxu0 0
        %583 = vmatpush.bf16.msra.mxu0 0
        %584 = vmatpush.bf16.msra.mxu0 0
        %585 = vmatpush.bf16.msra.mxu0 %v576
        %586 = vmatpush.bf16.msra.mxu0 %v575
        %587 = vmatmul.bf16.gmra.mxu0 %v511
        %v588 = vpop.f32.mrf.mxu0
        %v589 = vadd.f32 %v565, %v588
        %v590 = vpop.f32.mrf.mxu0
        %591 = vdwg.mxu0
        %v592 = vpack.c.bf16 %v523, %v523
        %v593 = vpack.c.bf16 %v556, %v556
        %vm594 = vcmask 64512
        %v596 = vsel %vm594, %v592, 0
        %v599 = vsel %vm594, %v593, 0
        %601 = vmatpush.bf16.xpose.msra.mxu0 0
        %602 = vmatpush.bf16.xpose.msra.mxu0 0
        %603 = vmatpush.bf16.xpose.msra.mxu0 0
        %604 = vmatpush.bf16.xpose.msra.mxu0 0
        %605 = vmatpush.bf16.xpose.msra.mxu0 0
        %606 = vmatpush.bf16.xpose.msra.mxu0 0
        %607 = vmatpush.bf16.xpose.msra.mxu0 0
        %608 = vmatpush.bf16.xpose.msra.mxu0 %v599
        %609 = vmatmul.bf16.gmra.mxu0 %v596
        %v610 = vpop.f32.mrf.mxu0
        %v611 = vadd.f32 0.0, %v610
        %v612 = vpop.f32.mrf.mxu0
        %613 = vdwg.mxu0
        %v614 = vmul.f32 %v611, 0.35355338
        %v615 = vadd.f32 %v614, %v488
        %v616 = vsel %vm594, %v615, -inf
        %617 = vmax.xlane.f32.xlu0 %v616
        %v618 = vpop.xlane.xlu0 %617
        %v619 = vsub.f32 %v615, %v618
        %v620 = vmul.f32 %v619, 1.442695
        %v621 = vpow.pop %v620
        %v622 = vsel %vm594, %v621, 0.0
        %623 = vadd.xlane.f32.xlu0 %v622
        %v624 = vpop.xlane.xlu0 %623
        %v625 = vrcp.pop %v624
        %v626 = vmul.f32 %v621, %v625
        %v627 = vpack.c.bf16 %v626, %v626
        %v628 = vpack.c.bf16 %v589, %v589
        %v630 = vsel %vm594, %v627, 0
        %vm632 = vcmask 1043456
        %v634 = vsel %vm632, %v628, 0
        %636 = vmatpush.bf16.msra.mxu0 0
        %637 = vmatpush.bf16.msra.mxu0 0
        %638 = vmatpush.bf16.msra.mxu0 0
        %639 = vmatpush.bf16.msra.mxu0 0
        %640 = vmatpush.bf16.msra.mxu0 0
        %641 = vmatpush.bf16.msra.mxu0 0
        %642 = vmatpush.bf16.msra.mxu0 0
        %643 = vmatpush.bf16.msra.mxu0 %v634
        %644 = vmatmul.bf16.gmra.mxu0 %v630
        %v645 = vpop.f32.mrf.mxu0
        %v646 = vadd.f32 0.0, %v645
        %v647 = vpop.f32.mrf.mxu0
        %648 = vdwg.mxu0
        %v649 = vpack.c.bf16 %v646, %v646
        %v650 = vld [vmem:[%s485] sm:$0xf]
        %v652 = vsel %vm594, %v649, 0
        %v655 = vsel %vm632, %v650, 0
        %657 = vmatpush.bf16.msra.mxu0 0
        %658 = vmatpush.bf16.msra.mxu0 0
        %659 = vmatpush.bf16.msra.mxu0 0
        %660 = vmatpush.bf16.msra.mxu0 0
        %661 = vmatpush.bf16.msra.mxu0 0
        %662 = vmatpush.bf16.msra.mxu0 0
        %663 = vmatpush.bf16.msra.mxu0 0
        %664 = vmatpush.bf16.msra.mxu0 %v655
        %665 = vmatmul.bf16.gmra.mxu0 %v652
        %v666 = vpop.f32.mrf.mxu0
        %v667 = vadd.f32 0.0, %v666
        %v668 = vpop.f32.mrf.mxu0
        %669 = vdwg.mxu0
        %p670 = scmp.eq.s32.totalorder %s29, 0
        // Predicated region
        $region61: #{tpu_custom_call.1} parent=59 // pred_check
          %p671 = pneg %p670
        $region62: #{tpu_custom_call.1} parent=59 // pred_check_branch
          %673 = sbr.rel (%p671) target = $region64
        $region63: #{tpu_custom_call.1} parent=59 // pred_region
          %v674 = vld [vmem:[%s9] sm:$0x1]
          %v676 = vperm.slane %v674, 0
          %v678 = vadd.f32 %v667, %v676
          %679 = vst.msk [vmem:[%s453] sm:$0xff] %vm509, %v678
        $region64: #{tpu_custom_call.1} parent=59 // pred_fallthru
          _
        %p680 = scmp.gt.s32.totalorder %s29, 0
        // Predicated region
        $region65: #{tpu_custom_call.1} parent=59 // pred_check
          %p681 = pneg %p680
        $region66: #{tpu_custom_call.1} parent=59 // pred_check_branch
          %683 = sbr.rel (%p681) target = $region68
        $region67: #{tpu_custom_call.1} parent=59 // pred_region
          %v684 = vld [vmem:[%s453] sm:$0xff]
          %v685 = vadd.f32 %v684, %v667
          %686 = vst.msk [vmem:[%s453] sm:$0xff] %vm509, %v685
        $region68: #{tpu_custom_call.1} parent=59 // pred_fallthru
          _
        %s687 = sand.u32 %s294, 1
        %s688 = scalar_lea.sflag [#allocation3], %s687
        %s689 = sand.u32 %s294, 1
        %s690 = smul.addr %s689, 8
        %s691 = scalar_lea.vmem [#allocation2], %s690
        // Predicated region
        $region69: #{tpu_custom_call.1} parent=59 // pred_check
          %p692 = pneg %p304
        $region70: #{tpu_custom_call.1} parent=59 // pred_check_branch
          %694 = sbr.rel (%p692) target = $region72
        $region71: #{tpu_custom_call.1} parent=59 // pred_region
          %696 = vsyncadd %s688, 0
          %s697 = smul.addr %s28, 8
          %s698 = scalar_lea.hbm %s10, %s697
          %s700 = sshll.u32 %s691, 4
          %s701 = int_to_ptr.vmem [resolvable:$true] %s700
          %s702 = sshll.u32 %s698, 4
          %s703 = int_to_ptr.hbm [resolvable:$true] %s702
          %705 = dma.vmem_to_hbm [thread:$0]  %s701, 128, %s703, %s688
        $region72: #{tpu_custom_call.1} parent=59 // pred_fallthru
          _
      $region60: #{tpu_custom_call.1} parent=5 // pred_fallthru
        _
      %p706 = scmp.le.s32.totalorder 2, %s19
      // Predicated region
      $region73: #{tpu_custom_call.1} parent=5 // pred_check
        %p707 = pneg %p706
      $region74: #{tpu_custom_call.1} parent=5 // pred_check_branch
        %709 = sbr.rel (%p707) target = $region76
      $region75: #{tpu_custom_call.1} parent=5 // pred_region
        %s710 = ssub.s32 %s19, 2
        // Predicated region
        $region77: #{tpu_custom_call.1} parent=75 // pred_check
          %p711 = pneg %p310
        $region78: #{tpu_custom_call.1} parent=75 // pred_check_branch
          %713 = sbr.rel (%p711) target = $region80
        $region79: #{tpu_custom_call.1} parent=75 // pred_region
          %s714 = sand.u32 %s295, 1
          %s715 = scalar_lea.sflag [#allocation3], %s714
          %s716 = sand.u32 %s295, 1
          %s717 = smul.addr %s716, 8
          %s718 = scalar_lea.vmem [#allocation2], %s717
          %720 = dma.done %s715, 128
        $region80: #{tpu_custom_call.1} parent=75 // pred_fallthru
          _
      $region76: #{tpu_custom_call.1} parent=5 // pred_fallthru
        _
    $region6: #{tpu_custom_call.1} parent=1 // loop_footer
      %s23 = sadd.s32 1, %s19
    $region7: #{tpu_custom_call.1} parent=1 // loop_footer_branch
      %18 = sbr.rel target = $region3
    $region8: #{tpu_custom_call.1} parent=1 // loop_exit
      _
    %721 = vsyncpa [#allocation3], 1
    %s722 = scalar_lea.sflag [#allocation3], 1
    %723 = vsyncpa %s722, 1

</llo_original>
